<compile_context>
chip_gen: v7x
topology: tpu7x:2x2x1
jax: 0.10.0
libtpu: 0.0.40
codegen_flags: <defaults>
</compile_context>

<pallas_src>
import jax
import jax.numpy as jnp
from jax.experimental import pallas as pl
from jax.experimental.pallas import tpu as pltpu


# ------------------------------ VMEM sizing --------------------------------
def _padded_bytes(shape, dtype):
    """Approximate VMEM footprint of a tile ((8,128)-style padding of last 2 dims)."""
    itemsize = jnp.dtype(dtype).itemsize
    sub = {4: 8, 2: 16, 1: 32}.get(itemsize, 8)
    s = [int(d) for d in shape]
    if len(s) >= 1:
        s[-1] = -(-s[-1] // 128) * 128
    if len(s) >= 2:
        s[-2] = -(-s[-2] // sub) * sub
    n = 1
    for d in s:
        n *= d
    return n * itemsize


def _vmem_limit(working_bytes):
    """Generation-aware scoped-VMEM request (cap ~48 MiB on v7x, ~100 MiB on v5e/v6e)."""
    try:
        phys = int(pltpu.get_tpu_info().vmem_capacity_bytes)
    except Exception:
        phys = 128 << 20
    cap = max(min(phys - (16 << 20), 100 << 20), 16 << 20)
    need = int(working_bytes) + (8 << 20)
    return int(min(max(need, 32 << 20), cap))


# ----------------------------- encoder kernel ------------------------------
# Input layout (B, 3, N) (PyTorch conv layout).  grid = (B, N // TN).
# Per point-tile: relu(bn1(conv1)) -> relu(bn2(conv2)) -> bn3(conv3) -> running max
# over points (lane reduce).  On the last tile: relu(bn4(linear(max))).
_ENC_KEYS = ("w1", "b1", "w2", "b2", "w3", "b3", "wl", "bl")


def _encoder_kernel(x_ref, w1, b1, w2, b2, w3, b3, wl, bl, out_ref, mx):
    t = pl.program_id(1)

    x = x_ref[0]                          # (3, TN) f32
    w1v = w1[...]                         # (64, 3) f32 (BN folded)
    # conv1 has K=3: keep it off the MXU -> three VPU broadcast multiply-adds.
    h = (w1v[:, 0:1] * x[0:1, :] +
         w1v[:, 1:2] * x[1:2, :] +
         w1v[:, 2:3] * x[2:3, :] + b1[...])                           # (64, TN)
    h = jnp.maximum(h, 0.0)                                           # relu(bn1(conv1))
    h = jnp.dot(w2[...], h.astype(jnp.bfloat16),
                preferred_element_type=jnp.float32) + b2[...]
    h = jnp.maximum(h, 0.0)                                           # relu(bn2(conv2))
    h = jnp.dot(w3[...], h.astype(jnp.bfloat16),
                preferred_element_type=jnp.float32) + b3[...]         # bn3(conv3)

    tile_max = jnp.max(h, axis=1, keepdims=True)                      # (nlat, 1)

    @pl.when(t == 0)
    def _init():
        mx[...] = jnp.full_like(mx, -jnp.inf)

    mx[...] = jnp.maximum(mx[...], tile_max)

    @pl.when(t == pl.num_programs(1) - 1)
    def _final():
        g = jnp.dot(wl[...], mx[...].astype(jnp.bfloat16),
                    preferred_element_type=jnp.float32) + bl[...]     # (nlat, 1)
        out_ref[0] = jnp.maximum(g, 0.0)                              # relu(bn4(lin))


def encode(x_t, enc, *, tile_n=None):
    """x_t: (B, 3, N) float32 -> (B, nlatent) float32."""
    B, _, N = x_t.shape
    nlat = enc["w3"].shape[0]

    if tile_n is None:
        tile_n = N
        for cand in (4096, 2048, 1024, 512, 256, 128):
            if N % cand == 0:
                tile_n = cand
                break
    assert N % tile_n == 0 and (tile_n % 128 == 0 or tile_n == N)
    n_tiles = N // tile_n

    in_specs = [pl.BlockSpec((1, 3, tile_n), lambda b, t: (b, 0, t))]
    for k in _ENC_KEYS:
        in_specs.append(pl.BlockSpec(enc[k].shape, lambda b, t: (0, 0)))

    working = _padded_bytes((1, 3, tile_n), jnp.float32)
    for k in _ENC_KEYS:
        working += _padded_bytes(enc[k].shape, enc[k].dtype)
    working += _padded_bytes((1, nlat, 1), jnp.float32)               # out block
    working *= 2                                                      # double buffering
    working += 4 * _padded_bytes((max(nlat, 128), tile_n), jnp.float32)  # live activations
    working += _padded_bytes((nlat, 1), jnp.float32)                  # scratch

    # TODO(synk): on v7x with B == 1 the second TensorCore idles; splitting the point
    # axis into two parallel halves with a follow-up max-combine would use both cores.
    out = pl.pallas_call(
        _encoder_kernel,
        out_shape=jax.ShapeDtypeStruct((B, nlat, 1), jnp.float32),
        grid=(B, n_tiles),
        in_specs=in_specs,
        out_specs=pl.BlockSpec((1, nlat, 1), lambda b, t: (b, 0, 0)),
        scratch_shapes=[pltpu.VMEM((nlat, 1), jnp.float32)],
        compiler_params=pltpu.CompilerParams(
            dimension_semantics=("parallel", "arbitrary"),
            vmem_limit_bytes=_vmem_limit(working)),
    )(x_t, *[enc[k] for k in _ENC_KEYS])
    return out[:, :, 0]


# ----------------------------- decoder kernel ------------------------------
# grid = (P, B, Np // TNp); one step = one mlpAdj on one (patch, batch, point-tile).
_DEC_KEYS = ("w1g", "w2", "b2", "w3", "b3", "w4", "b4")


def decode_all(grid_t, fc_all, dec, *, tile_np=None):
    """grid_t: (P, B, 2, Np) f32, fc_all: (P, B, nl2, 1) f32 (latent part of layer 1,
       precomputed in the wrapper) -> (P, B, 3, Np) f32 (lane-dense point axis)."""
    P, B, pd, Np = grid_t.shape
    assert pd == 2
    nl2 = dec["w1g"].shape[1]

    if tile_np is None:
        tile_np = Np
        for cand in (512, 256, 128):
            if Np % cand == 0:
                tile_np = cand
                break
    assert Np % tile_np == 0 and (tile_np % 128 == 0 or tile_np == Np)
    n_row_tiles = Np // tile_np

    def kernel(g_ref, fc_ref, w1g, w2, b2, w3, b3, w4, b4, out_ref):
        g = g_ref[0, 0]                                  # (2, TNp) f32
        fc = fc_ref[0, 0]                                # (nl2, 1) f32
        w1 = w1g[0]                                      # (nl2, 2) f32
        # Layer 1: K=2 grid part on the VPU (two broadcast mul-adds) + the latent
        # contribution as a lane-broadcast (nl2, 1) bias — nothing is materialized.
        h = w1[:, 0:1] * g[0:1, :] + w1[:, 1:2] * g[1:2, :] + fc       # (nl2, TNp)
        h = jnp.maximum(h, 0.0)                                        # relu(bn1(conv1))
        h = jnp.dot(w2[0], h.astype(jnp.bfloat16),
                    preferred_element_type=jnp.float32) + b2[0]
        h = jnp.maximum(h, 0.0)                                        # relu(bn2(conv2))
        h = jnp.dot(w3[0], h.astype(jnp.bfloat16),
                    preferred_element_type=jnp.float32) + b3[0]
        h = jnp.maximum(h, 0.0)                                        # relu(bn3(conv3))
        o = jnp.dot(w4[0], h.astype(jnp.bfloat16),
                    preferred_element_type=jnp.float32) + b4[0]        # (3, TNp)
        out_ref[0, 0] = jnp.tanh(o)                                    # tanh(conv4)

    in_specs = [
        pl.BlockSpec((1, 1, pd, tile_np), lambda p, b, t: (p, b, 0, t)),
        pl.BlockSpec((1, 1, nl2, 1), lambda p, b, t: (p, b, 0, 0)),
    ]
    for k in _DEC_KEYS:
        shp = dec[k].shape
        in_specs.append(pl.BlockSpec((1,) + shp[1:], lambda p, b, t: (p, 0, 0)))

    working = _padded_bytes((1, 1, pd, tile_np), jnp.float32)
    working += _padded_bytes((1, 1, nl2, 1), jnp.float32)
    for k in _DEC_KEYS:
        working += _padded_bytes((1,) + dec[k].shape[1:], dec[k].dtype)
    working += _padded_bytes((1, 1, 3, tile_np), jnp.float32)          # out block
    working *= 2                                                       # double buffering
    working += 4 * _padded_bytes((nl2, tile_np), jnp.float32)          # live activations

    out = pl.pallas_call(
        kernel,
        out_shape=jax.ShapeDtypeStruct((P, B, 3, Np), jnp.float32),
        grid=(P, B, n_row_tiles),
        in_specs=in_specs,
        out_specs=pl.BlockSpec((1, 1, 3, tile_np), lambda p, b, t: (p, b, 0, t)),
        compiler_params=pltpu.CompilerParams(
            dimension_semantics=("parallel", "parallel", "parallel"),
            vmem_limit_bytes=_vmem_limit(working)),
    )(grid_t, fc_all, *[dec[k] for k in _DEC_KEYS])
    return out


# --------------------------- parameter init (glue) --------------------------
def _conv_init(key, cin, cout):
    """PyTorch Conv1d(k=1)/Linear default init; weight stored as (Cout, Cin)."""
    kw, kb = jax.random.split(key)
    bound = 1.0 / (cin ** 0.5)
    w = jax.random.uniform(kw, (cout, cin), jnp.float32, -bound, bound)
    b = jax.random.uniform(kb, (cout, 1), jnp.float32, -bound, bound)
    return w, b


def _bn_affine(key, c, eps=1e-5):
    kg, kb, km, kv = jax.random.split(key, 4)
    gamma = 1.0 + 0.1 * jax.random.normal(kg, (c, 1), jnp.float32)
    beta = 0.1 * jax.random.normal(kb, (c, 1), jnp.float32)
    mean = 0.1 * jax.random.normal(km, (c, 1), jnp.float32)
    var = jnp.abs(jax.random.normal(kv, (c, 1), jnp.float32)) + 0.5
    scale = gamma * jax.lax.rsqrt(var + eps)
    shift = beta - mean * scale
    return scale, shift


def _fold_bn(w, b, scale, shift):
    """Fold eval-mode BatchNorm into the preceding layer: (w@x + b)*s + t."""
    return w * scale, b * scale + shift


def init_atlasnet_params(key, nlatent, npatch, patch_dim=2):
    """Returns (enc, dec) with BN pre-folded; MXU weights stored in bf16."""
    assert patch_dim == 2, "mlpAdj input channels are 2 + nlatent"
    nl2 = 2 + nlatent
    nl3, nl4 = nl2 // 2, nl2 // 4
    keys = iter(jax.random.split(key, 8 + 7 * npatch))

    enc = {}
    w, b = _fold_bn(*_conv_init(next(keys), 3, 64), *_bn_affine(next(keys), 64))
    enc["w1"], enc["b1"] = w, b                        # stays f32 (VPU layer)
    w, b = _fold_bn(*_conv_init(next(keys), 64, 128), *_bn_affine(next(keys), 128))
    enc["w2"], enc["b2"] = w.astype(jnp.bfloat16), b
    w, b = _fold_bn(*_conv_init(next(keys), 128, nlatent), *_bn_affine(next(keys), nlatent))
    enc["w3"], enc["b3"] = w.astype(jnp.bfloat16), b
    w, b = _fold_bn(*_conv_init(next(keys), nlatent, nlatent), *_bn_affine(next(keys), nlatent))
    enc["wl"], enc["bl"] = w.astype(jnp.bfloat16), b

    dims = [(nl2, nl2), (nl2, nl3), (nl3, nl4), (nl4, 3)]
    raw_w = {i: [] for i in range(1, 5)}
    raw_b = {i: [] for i in range(1, 5)}
    for _p in range(npatch):
        for li, (cin, cout) in enumerate(dims, start=1):
            w, b = _conv_init(next(keys), cin, cout)
            if li < 4:
                w, b = _fold_bn(w, b, *_bn_affine(next(keys), cout))
            raw_w[li].append(w)
            raw_b[li].append(b)

    dec = {}
    w1 = jnp.stack(raw_w[1])                              # (P, nl2, 2 + nlatent)
    dec["w1g"] = w1[:, :, :patch_dim]                     # (P, nl2, 2)   f32 (VPU layer)
    dec["w1f"] = w1[:, :, patch_dim:]                     # (P, nl2, nlat) f32 (XLA einsum)
    dec["b1"] = jnp.stack(raw_b[1])[:, :, 0]              # (P, nl2)       f32
    for li in (2, 3, 4):
        dec[f"w{li}"] = jnp.stack(raw_w[li]).astype(jnp.bfloat16)   # (P, Cout, Cin)
        dec[f"b{li}"] = jnp.stack(raw_b[li])                        # (P, Cout, 1) f32
    return enc, dec


# ------------------------------ full forward --------------------------------
def atlasnet_forward(x, enc, dec, *, npoint, npatch, patchDim, grid_key,
                     enc_tile_n=None, dec_tile_np=None):
    """x: (B, npoint, 3). Returns ((B, npatch*(npoint//npatch), 3) points, patch grids)."""
    assert patchDim == 2, "decoder input channels are 2 + nlatent"
    B = x.shape[0]
    Np = npoint // npatch

    x_t = jnp.transpose(x, (0, 2, 1))                          # (B, 3, N) — as in PyTorch
    feat = encode(x_t, enc, tile_n=enc_tile_n)                 # (B, nlatent) f32

    # Random patch grids, kept in the native (B, patchDim, Np) layout.
    gkeys = jax.random.split(grid_key, npatch)
    grids, patches = [], []
    for i in range(npatch):
        rg = jax.random.uniform(gkeys[i], (B, patchDim, Np), jnp.float32)
        rg = rg.at[:, 2:, :].set(0.0)                          # no-op for patchDim == 2
        patches.append(jnp.transpose(rg[0], (1, 0)))           # (Np, patchDim)
        grids.append(rg)
    grid_t = jnp.stack(grids, axis=0)                          # (P, B, 2, Np)

    # Latent contribution of decoder layer 1, hoisted out of the kernel:
    # one tiny XLA einsum instead of a per-step (rows, nl2) broadcast + w1f DMA.
    fc_all = (jnp.einsum('pck,bk->pbc', dec["w1f"], feat)
              + dec["b1"][:, None, :])[..., None]              # (P, B, nl2, 1) f32

    out = decode_all(grid_t, fc_all, dec, tile_np=dec_tile_np)  # (P, B, 3, Np)
    points = jnp.transpose(out, (1, 0, 3, 2)).reshape(B, npatch * Np, 3)
    return points, patches


if __name__ == "__main__":
    # Small shapes consistent with AtlasNet (patchDim must be 2 so the decoder's
    # (2 + nlatent) input channels match).  npoint/tile choices exercise both the
    # encoder running-max accumulator (2 point tiles) and the decoder row tiling.
    B, npoint, npatch, nlatent, patchDim = 2, 512, 2, 32, 2

    root = jax.random.PRNGKey(0)
    k_params, k_input, k_grid = jax.random.split(root, 3)

    enc_params, dec_params = init_atlasnet_params(k_params, nlatent, npatch,
                                                  patch_dim=patchDim)
    x = jax.random.normal(k_input, (B, npoint, 3), jnp.float32)

    points, patches = atlasnet_forward(
        x, enc_params, dec_params,
        npoint=npoint, npatch=npatch, patchDim=patchDim, grid_key=k_grid,
        enc_tile_n=256,    # 2 encoder point tiles -> running-max path
        dec_tile_np=128)   # 2 decoder row tiles per (patch, batch)

    points = jax.block_until_ready(points)
    patches = [jax.block_until_ready(p) for p in patches]

    assert points.shape == (B, npoint, 3), points.shape
    assert len(patches) == npatch and patches[0].shape == (npoint // npatch, patchDim)
    assert bool(jnp.all(jnp.isfinite(points)))
    print("KERNEL_OK")
</pallas_src>

<mosaic_0001>
module attributes {stable_mosaic.version = 11 : i64} {
  func.func @_encoder_kernel(%arg0: i32, %arg1: i32, %arg2: memref<1x3x256xf32, #tpu.memory_space<vmem>>, %arg3: memref<64x3xf32, #tpu.memory_space<vmem>>, %arg4: memref<64x1xf32, #tpu.memory_space<vmem>>, %arg5: memref<128x64xbf16, #tpu.memory_space<vmem>>, %arg6: memref<128x1xf32, #tpu.memory_space<vmem>>, %arg7: memref<32x128xbf16, #tpu.memory_space<vmem>>, %arg8: memref<32x1xf32, #tpu.memory_space<vmem>>, %arg9: memref<32x32xbf16, #tpu.memory_space<vmem>>, %arg10: memref<32x1xf32, #tpu.memory_space<vmem>>, %arg11: memref<1x32x1xf32, #tpu.memory_space<vmem>>, %arg12: memref<32x1xf32, #tpu.memory_space<vmem>>) attributes {dimension_semantics = [#tpu.dimension_semantics<parallel>, #tpu.dimension_semantics<arbitrary>], iteration_bounds = array<i64: 2, 2>, scalar_prefetch = 0 : i64, scratch_operands = 1 : i64, tpu.core_type = #tpu.core_type<tc>, window_params = [{transform_indices = @transform_0, window_bounds = array<i64: 1, 3, 256>}, {pipeline_mode = #tpu.pipeline_mode<synchronous>, transform_indices = @transform_1, window_bounds = array<i64: 64, 3>}, {pipeline_mode = #tpu.pipeline_mode<synchronous>, transform_indices = @transform_2, window_bounds = array<i64: 64, 1>}, {pipeline_mode = #tpu.pipeline_mode<synchronous>, transform_indices = @transform_3, window_bounds = array<i64: 128, 64>}, {pipeline_mode = #tpu.pipeline_mode<synchronous>, transform_indices = @transform_4, window_bounds = array<i64: 128, 1>}, {pipeline_mode = #tpu.pipeline_mode<synchronous>, transform_indices = @transform_5, window_bounds = array<i64: 32, 128>}, {pipeline_mode = #tpu.pipeline_mode<synchronous>, transform_indices = @transform_6, window_bounds = array<i64: 32, 1>}, {pipeline_mode = #tpu.pipeline_mode<synchronous>, transform_indices = @transform_7, window_bounds = array<i64: 32, 32>}, {pipeline_mode = #tpu.pipeline_mode<synchronous>, transform_indices = @transform_8, window_bounds = array<i64: 32, 1>}, {transform_indices = @transform_9, window_bounds = array<i64: 1, 32, 1>}]} {
    %c0 = arith.constant 0 : index
    %c0_0 = arith.constant 0 : index
    %c0_1 = arith.constant 0 : index
    %0 = vector.load %arg2[%c0, %c0_0, %c0_1] : memref<1x3x256xf32, #tpu.memory_space<vmem>>, vector<1x3x256xf32>
    %1 = vector.shape_cast %0 : vector<1x3x256xf32> to vector<3x256xf32>
    %c0_2 = arith.constant 0 : index
    %c0_3 = arith.constant 0 : index
    %2 = vector.load %arg3[%c0_2, %c0_3] : memref<64x3xf32, #tpu.memory_space<vmem>>, vector<64x3xf32>
    %3 = vector.extract_strided_slice %2 {offsets = [0, 0], sizes = [64, 1], strides = [1, 1]} : vector<64x3xf32> to vector<64x1xf32>
    %4 = vector.extract_strided_slice %1 {offsets = [0, 0], sizes = [1, 256], strides = [1, 1]} : vector<3x256xf32> to vector<1x256xf32>
    %5 = vector.broadcast %3 : vector<64x1xf32> to vector<64x256xf32>
    %6 = vector.broadcast %4 : vector<1x256xf32> to vector<64x256xf32>
    %7 = arith.mulf %5, %6 : vector<64x256xf32>
    %8 = vector.extract_strided_slice %2 {offsets = [0, 1], sizes = [64, 1], strides = [1, 1]} : vector<64x3xf32> to vector<64x1xf32>
    %9 = vector.extract_strided_slice %1 {offsets = [1, 0], sizes = [1, 256], strides = [1, 1]} : vector<3x256xf32> to vector<1x256xf32>
    %10 = vector.broadcast %8 : vector<64x1xf32> to vector<64x256xf32>
    %11 = vector.broadcast %9 : vector<1x256xf32> to vector<64x256xf32>
    %12 = arith.mulf %10, %11 : vector<64x256xf32>
    %13 = arith.addf %7, %12 : vector<64x256xf32>
    %14 = vector.extract_strided_slice %2 {offsets = [0, 2], sizes = [64, 1], strides = [1, 1]} : vector<64x3xf32> to vector<64x1xf32>
    %15 = vector.extract_strided_slice %1 {offsets = [2, 0], sizes = [1, 256], strides = [1, 1]} : vector<3x256xf32> to vector<1x256xf32>
    %16 = vector.broadcast %14 : vector<64x1xf32> to vector<64x256xf32>
    %17 = vector.broadcast %15 : vector<1x256xf32> to vector<64x256xf32>
    %18 = arith.mulf %16, %17 : vector<64x256xf32>
    %19 = arith.addf %13, %18 : vector<64x256xf32>
    %c0_4 = arith.constant 0 : index
    %c0_5 = arith.constant 0 : index
    %20 = vector.load %arg4[%c0_4, %c0_5] : memref<64x1xf32, #tpu.memory_space<vmem>>, vector<64x1xf32>
    %21 = vector.broadcast %20 : vector<64x1xf32> to vector<64x256xf32>
    %22 = arith.addf %19, %21 : vector<64x256xf32>
    %cst = arith.constant 0.000000e+00 : f32
    %23 = vector.broadcast %cst : f32 to vector<64x256xf32>
    %24 = arith.maximumf %22, %23 : vector<64x256xf32>
    %c0_6 = arith.constant 0 : index
    %c0_7 = arith.constant 0 : index
    %25 = vector.load %arg5[%c0_6, %c0_7] : memref<128x64xbf16, #tpu.memory_space<vmem>>, vector<128x64xbf16>
    %26 = arith.truncf %24 : vector<64x256xf32> to vector<64x256xbf16>
    %cst_8 = arith.constant dense<0.000000e+00> : vector<128x256xf32>
    %27 = tpu.matmul %25, %26, %cst_8 {dimension_numbers = #tpu.dot_dimension_numbers<[1], [0], [0], [1], [0, 0, 1, 1], [], []>} : vector<128x64xbf16>, vector<64x256xbf16>, vector<128x256xf32> -> vector<128x256xf32>
    %c0_9 = arith.constant 0 : index
    %c0_10 = arith.constant 0 : index
    %28 = vector.load %arg6[%c0_9, %c0_10] : memref<128x1xf32, #tpu.memory_space<vmem>>, vector<128x1xf32>
    %29 = vector.broadcast %28 : vector<128x1xf32> to vector<128x256xf32>
    %30 = arith.addf %27, %29 : vector<128x256xf32>
    %cst_11 = arith.constant 0.000000e+00 : f32
    %31 = vector.broadcast %cst_11 : f32 to vector<128x256xf32>
    %32 = arith.maximumf %30, %31 : vector<128x256xf32>
    %c0_12 = arith.constant 0 : index
    %c0_13 = arith.constant 0 : index
    %33 = vector.load %arg7[%c0_12, %c0_13] : memref<32x128xbf16, #tpu.memory_space<vmem>>, vector<32x128xbf16>
    %34 = arith.truncf %32 : vector<128x256xf32> to vector<128x256xbf16>
    %cst_14 = arith.constant dense<0.000000e+00> : vector<32x256xf32>
    %35 = tpu.matmul %33, %34, %cst_14 {dimension_numbers = #tpu.dot_dimension_numbers<[1], [0], [0], [1], [0, 0, 1, 1], [], []>} : vector<32x128xbf16>, vector<128x256xbf16>, vector<32x256xf32> -> vector<32x256xf32>
    %c0_15 = arith.constant 0 : index
    %c0_16 = arith.constant 0 : index
    %36 = vector.load %arg8[%c0_15, %c0_16] : memref<32x1xf32, #tpu.memory_space<vmem>>, vector<32x1xf32>
    %37 = vector.broadcast %36 : vector<32x1xf32> to vector<32x256xf32>
    %38 = arith.addf %35, %37 : vector<32x256xf32>
    %cst_17 = arith.constant dense<0xFF800000> : vector<32xf32>
    %39 = vector.multi_reduction <maximumf>, %38, %cst_17 [1] : vector<32x256xf32> to vector<32xf32>
    %40 = vector.shape_cast %39 : vector<32xf32> to vector<32x1xf32>
    %c0_i32 = arith.constant 0 : i32
    %41 = arith.cmpi eq, %arg1, %c0_i32 : i32
    %42 = arith.extui %41 : i1 to i32
    %c0_i32_18 = arith.constant 0 : i32
    %43 = arith.cmpi ne, %42, %c0_i32_18 : i32
    scf.if %43 {
      %cst_24 = arith.constant 0xFF800000 : f32
      %50 = vector.broadcast %cst_24 : f32 to vector<32x1xf32>
      %c0_25 = arith.constant 0 : index
      %c0_26 = arith.constant 0 : index
      %51 = vector.load %arg12[%c0_25, %c0_26] : memref<32x1xf32, #tpu.memory_space<vmem>>, vector<32x1xf32>
      tpu.vector_store %arg12[%c0_25, %c0_26], %50 {strides = array<i32>} : memref<32x1xf32, #tpu.memory_space<vmem>>, vector<32x1xf32>,
    } else {
    }
    %c0_19 = arith.constant 0 : index
    %c0_20 = arith.constant 0 : index
    %44 = vector.load %arg12[%c0_19, %c0_20] : memref<32x1xf32, #tpu.memory_space<vmem>>, vector<32x1xf32>
    %45 = arith.maximumf %44, %40 : vector<32x1xf32>
    %c0_21 = arith.constant 0 : index
    %c0_22 = arith.constant 0 : index
    %46 = vector.load %arg12[%c0_21, %c0_22] : memref<32x1xf32, #tpu.memory_space<vmem>>, vector<32x1xf32>
    tpu.vector_store %arg12[%c0_21, %c0_22], %45 {strides = array<i32>} : memref<32x1xf32, #tpu.memory_space<vmem>>, vector<32x1xf32>,
    %c1_i32 = arith.constant 1 : i32
    %47 = arith.cmpi eq, %arg1, %c1_i32 : i32
    %48 = arith.extui %47 : i1 to i32
    %c0_i32_23 = arith.constant 0 : i32
    %49 = arith.cmpi ne, %48, %c0_i32_23 : i32
    scf.if %49 {
      %c0_24 = arith.constant 0 : index
      %c0_25 = arith.constant 0 : index
      %50 = vector.load %arg9[%c0_24, %c0_25] : memref<32x32xbf16, #tpu.memory_space<vmem>>, vector<32x32xbf16>
      %c0_26 = arith.constant 0 : index
      %c0_27 = arith.constant 0 : index
      %51 = vector.load %arg12[%c0_26, %c0_27] : memref<32x1xf32, #tpu.memory_space<vmem>>, vector<32x1xf32>
      %52 = arith.truncf %51 : vector<32x1xf32> to vector<32x1xbf16>
      %cst_28 = arith.constant dense<0.000000e+00> : vector<32x1xf32>
      %53 = tpu.matmul %50, %52, %cst_28 {dimension_numbers = #tpu.dot_dimension_numbers<[1], [0], [0], [1], [0, 0, 1, 1], [], []>} : vector<32x32xbf16>, vector<32x1xbf16>, vector<32x1xf32> -> vector<32x1xf32>
      %c0_29 = arith.constant 0 : index
      %c0_30 = arith.constant 0 : index
      %54 = vector.load %arg10[%c0_29, %c0_30] : memref<32x1xf32, #tpu.memory_space<vmem>>, vector<32x1xf32>
      %55 = arith.addf %53, %54 : vector<32x1xf32>
      %cst_31 = arith.constant 0.000000e+00 : f32
      %56 = vector.broadcast %cst_31 : f32 to vector<32x1xf32>
      %57 = arith.maximumf %55, %56 : vector<32x1xf32>
      %c0_32 = arith.constant 0 : index
      %c0_33 = arith.constant 0 : index
      %c0_34 = arith.constant 0 : index
      %58 = vector.load %arg11[%c0_32, %c0_33, %c0_34] : memref<1x32x1xf32, #tpu.memory_space<vmem>>, vector<1x32x1xf32>
      %59 = vector.shape_cast %58 : vector<1x32x1xf32> to vector<32x1xf32>
      %60 = vector.shape_cast %57 : vector<32x1xf32> to vector<1x32x1xf32>
      tpu.vector_store %arg11[%c0_32, %c0_33, %c0_34], %60 {strides = array<i32>} : memref<1x32x1xf32, #tpu.memory_space<vmem>>, vector<1x32x1xf32>,
    } else {
    }
    return
  }
  func.func @transform_0(%arg0: i32, %arg1: i32) -> (i32, i32, i32) {
    %c0_i32 = arith.constant 0 : i32
    %c0_i32_0 = arith.constant 0 : i32
    return %arg0, %c0_i32, %arg1 : i32, i32, i32
  }
  func.func @transform_1(%arg0: i32, %arg1: i32) -> (i32, i32) {
    %c0_i32 = arith.constant 0 : i32
    %c0_i32_0 = arith.constant 0 : i32
    %c0_i32_1 = arith.constant 0 : i32
    return %c0_i32, %c0_i32_0 : i32, i32
  }
  func.func @transform_2(%arg0: i32, %arg1: i32) -> (i32, i32) {
    %c0_i32 = arith.constant 0 : i32
    %c0_i32_0 = arith.constant 0 : i32
    %c0_i32_1 = arith.constant 0 : i32
    return %c0_i32, %c0_i32_0 : i32, i32
  }
  func.func @transform_3(%arg0: i32, %arg1: i32) -> (i32, i32) {
    %c0_i32 = arith.constant 0 : i32
    %c0_i32_0 = arith.constant 0 : i32
    %c0_i32_1 = arith.constant 0 : i32
    return %c0_i32, %c0_i32_0 : i32, i32
  }
  func.func @transform_4(%arg0: i32, %arg1: i32) -> (i32, i32) {
    %c0_i32 = arith.constant 0 : i32
    %c0_i32_0 = arith.constant 0 : i32
    %c0_i32_1 = arith.constant 0 : i32
    return %c0_i32, %c0_i32_0 : i32, i32
  }
  func.func @transform_5(%arg0: i32, %arg1: i32) -> (i32, i32) {
    %c0_i32 = arith.constant 0 : i32
    %c0_i32_0 = arith.constant 0 : i32
    %c0_i32_1 = arith.constant 0 : i32
    return %c0_i32, %c0_i32_0 : i32, i32
  }
  func.func @transform_6(%arg0: i32, %arg1: i32) -> (i32, i32) {
    %c0_i32 = arith.constant 0 : i32
    %c0_i32_0 = arith.constant 0 : i32
    %c0_i32_1 = arith.constant 0 : i32
    return %c0_i32, %c0_i32_0 : i32, i32
  }
  func.func @transform_7(%arg0: i32, %arg1: i32) -> (i32, i32) {
    %c0_i32 = arith.constant 0 : i32
    %c0_i32_0 = arith.constant 0 : i32
    %c0_i32_1 = arith.constant 0 : i32
    return %c0_i32, %c0_i32_0 : i32, i32
  }
  func.func @transform_8(%arg0: i32, %arg1: i32) -> (i32, i32) {
    %c0_i32 = arith.constant 0 : i32
    %c0_i32_0 = arith.constant 0 : i32
    %c0_i32_1 = arith.constant 0 : i32
    return %c0_i32, %c0_i32_0 : i32, i32
  }
  func.func @transform_9(%arg0: i32, %arg1: i32) -> (i32, i32, i32) {
    %c0_i32 = arith.constant 0 : i32
    %c0_i32_0 = arith.constant 0 : i32
    %c0_i32_1 = arith.constant 0 : i32
    return %arg0, %c0_i32, %c0_i32_0 : i32, i32, i32
  }
}

</mosaic_0001>

<llo_original>
// kernel: tpu_custom_call.1
$region0: #{tpu_custom_call.1}
  #allocation0 [shape = 'u32[]', space=smem, size = 0x4, offset = 0x4, fixed_abs, tag = 'smem constant byte address 0x4 - core index']
  #allocation1 [shape = 'u32[144,128]{1,0:T(1,128)}', space=vmem, size = 0x12000, scoped, tag = 'internal scratch']
  #allocation2 [shape = 'f32[32,1]{1,0:T(8,128)}', space=vmem, size = 0x4000, scoped, tag = 'scratch operand']
  %s0 = inlined_call_operand.vmem [shape: f32[2,3,512], index: 0, kind: input, shape index: {}]
  %s1 = inlined_call_operand.vmem [shape: f32[64,3], index: 1, kind: input, shape index: {}]
  %s2 = inlined_call_operand.vmem [shape: f32[64,1], index: 2, kind: input, shape index: {}]
  %s3 = inlined_call_operand.vmem [shape: bf16[128,64], index: 3, kind: input, shape index: {}]
  %s4 = inlined_call_operand.vmem [shape: f32[128,1], index: 4, kind: input, shape index: {}]
  %s5 = inlined_call_operand.vmem [shape: bf16[32,128], index: 5, kind: input, shape index: {}]
  %s6 = inlined_call_operand.vmem [shape: f32[32,1], index: 6, kind: input, shape index: {}]
  %s7 = inlined_call_operand.vmem [shape: bf16[32,32], index: 7, kind: input, shape index: {}]
  %s8 = inlined_call_operand.vmem [shape: f32[32,1], index: 8, kind: input, shape index: {}]
  %s9 = inlined_call_operand.vmem [shape: f32[2,32,1], index: 9, kind: output, shape index: {}]
  %s10 = sld [smem:[#allocation0]]
  $region77: #{tpu_custom_call.1} parent=0
    _
  %s12 = ssub.s32 1, %s10
  %s13 = scalar_select 0, %s12, %s10
  loop: start=0, step=1, limit=6
  $region2: #{tpu_custom_call.1} parent=0 // loop_pre_header
    _
  $region3: #{tpu_custom_call.1} parent=0 // loop_header
    %s15 = sphi 0, %s19
    %p16 = scmp.ge.s32.totalorder %s15, 6
    %s22 = sphi 0, %s34
    %s23 = sphi 0, %s30
    %s24 = sphi 0, %s22
    %s25 = sphi 0, %s23
    %s26 = sphi 0, %s24
    %s27 = sphi 0, %s25
    %s39 = sphi 0, %s41
    %s42 = sphi 0, %s39
    %s43 = sphi 0, %s42
    %s59 = sphi 0, %s43
    %s63 = sphi 0, %s63
    %s65 = sphi 0, %s63
    %s66 = sphi 0, %s65
    %s80 = sphi 0, %s66
    %s84 = sphi 0, %s84
    %s86 = sphi 0, %s84
    %s87 = sphi 0, %s86
    %s101 = sphi 0, %s87
    %s105 = sphi 0, %s105
    %s107 = sphi 0, %s105
    %s108 = sphi 0, %s107
    %s122 = sphi 0, %s108
    %s126 = sphi 0, %s126
    %s128 = sphi 0, %s126
    %s129 = sphi 0, %s128
    %s143 = sphi 0, %s129
    %s147 = sphi 0, %s147
    %s149 = sphi 0, %s147
    %s150 = sphi 0, %s149
    %s164 = sphi 0, %s150
    %s168 = sphi 0, %s168
    %s170 = sphi 0, %s168
    %s171 = sphi 0, %s170
    %s185 = sphi 0, %s171
    %s189 = sphi 0, %s189
    %s191 = sphi 0, %s189
    %s192 = sphi 0, %s191
    %s206 = sphi 0, %s192
    %s210 = sphi 0, %s210
    %s212 = sphi 0, %s210
    %s213 = sphi 0, %s212
    %s227 = sphi 0, %s213
    %s233 = sphi 0, %s235
    %s236 = sphi 0, %s233
    %s237 = sphi 0, %s236
    %s253 = sphi 0, %s237
  $region4: #{tpu_custom_call.1} parent=0 // loop_header_branch
    %18 = sbr.rel (%p16) target = $region8
  $region5: #{tpu_custom_call.1} parent=0 // loop_body
    %s20 = ssub.s32 %s15, 1
    %s21 = ssub.s32 %s15, 2
    %s28 = sadd.s32 1, %s23
    %p29 = scmp.ge.s32.totalorder %s28, 2
    %s30 = scalar_select %p29, 0, %s28
    %s31 = sadd.s32 1, %s22
    %s32 = scalar_select %p29, %s31, %s22
    %p33 = scmp.ge.s32.totalorder %s32, 2
    %s34 = scalar_select %p33, 0, %s32
    %s35 = ssub.s32 %s22, %s34
    %s36 = ssub.s32 %s23, %s30
    %s37 = sor.u32 %s35, %s36
    %p38 = scmp.eq.s32.totalorder %s37, 0
    %s40 = sadd.s32 %s39, 1
    %s41 = scalar_select %p38, %s39, %s40
    %p44 = pneg %p38
    %p45 = scmp.eq.s32.totalorder %s15, 3
    %p46 = por %p44, %p45
    %p47 = scmp.ne.s32.totalorder %s39, %s42
    %p48 = scmp.eq.s32.totalorder %s15, 0
    %p49 = por %p47, %p48
    %p50 = scmp.ne.s32.totalorder %s39, %s42
    %p51 = scmp.eq.s32.totalorder %s20, 3
    %p52 = por %p50, %p51
    %p53 = scmp.ne.s32.totalorder %s42, %s43
    %p54 = scmp.eq.s32.totalorder %s20, 0
    %p55 = por %p53, %p54
    %p56 = scmp.ne.s32.totalorder %s42, %s43
    %p57 = scmp.eq.s32.totalorder %s21, 3
    %p58 = por %p56, %p57
    %p60 = scmp.ne.s32.totalorder %s43, %s59
    %p61 = scmp.eq.s32.totalorder %s21, 0
    %p62 = por %p60, %p61
    %s64 = sadd.s32 %s63, 1
    %p67 = scmp.eq.s32.totalorder %s15, 3
    %p68 = scmp.ne.s32.totalorder %s63, %s65
    %p69 = scmp.eq.s32.totalorder %s15, 0
    %p70 = por %p68, %p69
    %p71 = scmp.ne.s32.totalorder %s63, %s65
    %p72 = scmp.eq.s32.totalorder %s20, 3
    %p73 = por %p71, %p72
    %p74 = scmp.ne.s32.totalorder %s65, %s66
    %p75 = scmp.eq.s32.totalorder %s20, 0
    %p76 = por %p74, %p75
    %p77 = scmp.ne.s32.totalorder %s65, %s66
    %p78 = scmp.eq.s32.totalorder %s21, 3
    %p79 = por %p77, %p78
    %p81 = scmp.ne.s32.totalorder %s66, %s80
    %p82 = scmp.eq.s32.totalorder %s21, 0
    %p83 = por %p81, %p82
    %s85 = sadd.s32 %s84, 1
    %p88 = scmp.eq.s32.totalorder %s15, 3
    %p89 = scmp.ne.s32.totalorder %s84, %s86
    %p90 = scmp.eq.s32.totalorder %s15, 0
    %p91 = por %p89, %p90
    %p92 = scmp.ne.s32.totalorder %s84, %s86
    %p93 = scmp.eq.s32.totalorder %s20, 3
    %p94 = por %p92, %p93
    %p95 = scmp.ne.s32.totalorder %s86, %s87
    %p96 = scmp.eq.s32.totalorder %s20, 0
    %p97 = por %p95, %p96
    %p98 = scmp.ne.s32.totalorder %s86, %s87
    %p99 = scmp.eq.s32.totalorder %s21, 3
    %p100 = por %p98, %p99
    %p102 = scmp.ne.s32.totalorder %s87, %s101
    %p103 = scmp.eq.s32.totalorder %s21, 0
    %p104 = por %p102, %p103
    %s106 = sadd.s32 %s105, 1
    %p109 = scmp.eq.s32.totalorder %s15, 3
    %p110 = scmp.ne.s32.totalorder %s105, %s107
    %p111 = scmp.eq.s32.totalorder %s15, 0
    %p112 = por %p110, %p111
    %p113 = scmp.ne.s32.totalorder %s105, %s107
    %p114 = scmp.eq.s32.totalorder %s20, 3
    %p115 = por %p113, %p114
    %p116 = scmp.ne.s32.totalorder %s107, %s108
    %p117 = scmp.eq.s32.totalorder %s20, 0
    %p118 = por %p116, %p117
    %p119 = scmp.ne.s32.totalorder %s107, %s108
    %p120 = scmp.eq.s32.totalorder %s21, 3
    %p121 = por %p119, %p120
    %p123 = scmp.ne.s32.totalorder %s108, %s122
    %p124 = scmp.eq.s32.totalorder %s21, 0
    %p125 = por %p123, %p124
    %s127 = sadd.s32 %s126, 1
    %p130 = scmp.eq.s32.totalorder %s15, 3
    %p131 = scmp.ne.s32.totalorder %s126, %s128
    %p132 = scmp.eq.s32.totalorder %s15, 0
    %p133 = por %p131, %p132
    %p134 = scmp.ne.s32.totalorder %s126, %s128
    %p135 = scmp.eq.s32.totalorder %s20, 3
    %p136 = por %p134, %p135
    %p137 = scmp.ne.s32.totalorder %s128, %s129
    %p138 = scmp.eq.s32.totalorder %s20, 0
    %p139 = por %p137, %p138
    %p140 = scmp.ne.s32.totalorder %s128, %s129
    %p141 = scmp.eq.s32.totalorder %s21, 3
    %p142 = por %p140, %p141
    %p144 = scmp.ne.s32.totalorder %s129, %s143
    %p145 = scmp.eq.s32.totalorder %s21, 0
    %p146 = por %p144, %p145
    %s148 = sadd.s32 %s147, 1
    %p151 = scmp.eq.s32.totalorder %s15, 3
    %p152 = scmp.ne.s32.totalorder %s147, %s149
    %p153 = scmp.eq.s32.totalorder %s15, 0
    %p154 = por %p152, %p153
    %p155 = scmp.ne.s32.totalorder %s147, %s149
    %p156 = scmp.eq.s32.totalorder %s20, 3
    %p157 = por %p155, %p156
    %p158 = scmp.ne.s32.totalorder %s149, %s150
    %p159 = scmp.eq.s32.totalorder %s20, 0
    %p160 = por %p158, %p159
    %p161 = scmp.ne.s32.totalorder %s149, %s150
    %p162 = scmp.eq.s32.totalorder %s21, 3
    %p163 = por %p161, %p162
    %p165 = scmp.ne.s32.totalorder %s150, %s164
    %p166 = scmp.eq.s32.totalorder %s21, 0
    %p167 = por %p165, %p166
    %s169 = sadd.s32 %s168, 1
    %p172 = scmp.eq.s32.totalorder %s15, 3
    %p173 = scmp.ne.s32.totalorder %s168, %s170
    %p174 = scmp.eq.s32.totalorder %s15, 0
    %p175 = por %p173, %p174
    %p176 = scmp.ne.s32.totalorder %s168, %s170
    %p177 = scmp.eq.s32.totalorder %s20, 3
    %p178 = por %p176, %p177
    %p179 = scmp.ne.s32.totalorder %s170, %s171
    %p180 = scmp.eq.s32.totalorder %s20, 0
    %p181 = por %p179, %p180
    %p182 = scmp.ne.s32.totalorder %s170, %s171
    %p183 = scmp.eq.s32.totalorder %s21, 3
    %p184 = por %p182, %p183
    %p186 = scmp.ne.s32.totalorder %s171, %s185
    %p187 = scmp.eq.s32.totalorder %s21, 0
    %p188 = por %p186, %p187
    %s190 = sadd.s32 %s189, 1
    %p193 = scmp.eq.s32.totalorder %s15, 3
    %p194 = scmp.ne.s32.totalorder %s189, %s191
    %p195 = scmp.eq.s32.totalorder %s15, 0
    %p196 = por %p194, %p195
    %p197 = scmp.ne.s32.totalorder %s189, %s191
    %p198 = scmp.eq.s32.totalorder %s20, 3
    %p199 = por %p197, %p198
    %p200 = scmp.ne.s32.totalorder %s191, %s192
    %p201 = scmp.eq.s32.totalorder %s20, 0
    %p202 = por %p200, %p201
    %p203 = scmp.ne.s32.totalorder %s191, %s192
    %p204 = scmp.eq.s32.totalorder %s21, 3
    %p205 = por %p203, %p204
    %p207 = scmp.ne.s32.totalorder %s192, %s206
    %p208 = scmp.eq.s32.totalorder %s21, 0
    %p209 = por %p207, %p208
    %s211 = sadd.s32 %s210, 1
    %p214 = scmp.eq.s32.totalorder %s15, 3
    %p215 = scmp.ne.s32.totalorder %s210, %s212
    %p216 = scmp.eq.s32.totalorder %s15, 0
    %p217 = por %p215, %p216
    %p218 = scmp.ne.s32.totalorder %s210, %s212
    %p219 = scmp.eq.s32.totalorder %s20, 3
    %p220 = por %p218, %p219
    %p221 = scmp.ne.s32.totalorder %s212, %s213
    %p222 = scmp.eq.s32.totalorder %s20, 0
    %p223 = por %p221, %p222
    %p224 = scmp.ne.s32.totalorder %s212, %s213
    %p225 = scmp.eq.s32.totalorder %s21, 3
    %p226 = por %p224, %p225
    %p228 = scmp.ne.s32.totalorder %s213, %s227
    %p229 = scmp.eq.s32.totalorder %s21, 0
    %p230 = por %p228, %p229
    %s231 = ssub.s32 %s22, %s34
    %p232 = scmp.eq.s32.totalorder %s231, 0
    %s234 = sadd.s32 %s233, 1
    %s235 = scalar_select %p232, %s233, %s234
    %p238 = pneg %p232
    %p239 = scmp.eq.s32.totalorder %s15, 3
    %p240 = por %p238, %p239
    %p241 = scmp.ne.s32.totalorder %s233, %s236
    %p242 = scmp.eq.s32.totalorder %s15, 0
    %p243 = por %p241, %p242
    %p244 = scmp.ne.s32.totalorder %s233, %s236
    %p245 = scmp.eq.s32.totalorder %s20, 3
    %p246 = por %p244, %p245
    %p247 = scmp.ne.s32.totalorder %s236, %s237
    %p248 = scmp.eq.s32.totalorder %s20, 0
    %p249 = por %p247, %p248
    %p250 = scmp.ne.s32.totalorder %s236, %s237
    %p251 = scmp.eq.s32.totalorder %s21, 3
    %p252 = por %p250, %p251
    %p254 = scmp.ne.s32.totalorder %s237, %s253
    %p255 = scmp.eq.s32.totalorder %s21, 0
    %p256 = por %p254, %p255
    %p257 = scmp.le.s32.totalorder 1, %s15
    %p258 = scmp.lt.s32.totalorder %s15, 5
    %p259 = pnand %p257, %p258
    %p260 = pneg %p259
    // Predicated region
    $region9: #{tpu_custom_call.1} parent=5 // pred_check
      _
    $region10: #{tpu_custom_call.1} parent=5 // pred_check_branch
      %262 = sbr.rel (%p259) target = $region12
    $region11: #{tpu_custom_call.1} parent=5 // pred_region
      %s263 = ssub.s32 %s15, 1
      // Predicated region
      $region13: #{tpu_custom_call.1} parent=11 // pred_check
        %p264 = pneg %p76
      $region14: #{tpu_custom_call.1} parent=11 // pred_check_branch
        %266 = sbr.rel (%p264) target = $region16
      $region15: #{tpu_custom_call.1} parent=11 // pred_region
        _
      $region16: #{tpu_custom_call.1} parent=11 // pred_fallthru
        _
      // Predicated region
      $region17: #{tpu_custom_call.1} parent=11 // pred_check
        %p267 = pneg %p97
      $region18: #{tpu_custom_call.1} parent=11 // pred_check_branch
        %269 = sbr.rel (%p267) target = $region20
      $region19: #{tpu_custom_call.1} parent=11 // pred_region
        _
      $region20: #{tpu_custom_call.1} parent=11 // pred_fallthru
        _
      // Predicated region
      $region21: #{tpu_custom_call.1} parent=11 // pred_check
        %p270 = pneg %p118
      $region22: #{tpu_custom_call.1} parent=11 // pred_check_branch
        %272 = sbr.rel (%p270) target = $region24
      $region23: #{tpu_custom_call.1} parent=11 // pred_region
        _
      $region24: #{tpu_custom_call.1} parent=11 // pred_fallthru
        _
      // Predicated region
      $region25: #{tpu_custom_call.1} parent=11 // pred_check
        %p273 = pneg %p139
      $region26: #{tpu_custom_call.1} parent=11 // pred_check_branch
        %275 = sbr.rel (%p273) target = $region28
      $region27: #{tpu_custom_call.1} parent=11 // pred_region
        _
      $region28: #{tpu_custom_call.1} parent=11 // pred_fallthru
        _
      // Predicated region
      $region29: #{tpu_custom_call.1} parent=11 // pred_check
        %p276 = pneg %p160
      $region30: #{tpu_custom_call.1} parent=11 // pred_check_branch
        %278 = sbr.rel (%p276) target = $region32
      $region31: #{tpu_custom_call.1} parent=11 // pred_region
        _
      $region32: #{tpu_custom_call.1} parent=11 // pred_fallthru
        _
      // Predicated region
      $region33: #{tpu_custom_call.1} parent=11 // pred_check
        %p279 = pneg %p181
      $region34: #{tpu_custom_call.1} parent=11 // pred_check_branch
        %281 = sbr.rel (%p279) target = $region36
      $region35: #{tpu_custom_call.1} parent=11 // pred_region
        _
      $region36: #{tpu_custom_call.1} parent=11 // pred_fallthru
        _
      // Predicated region
      $region37: #{tpu_custom_call.1} parent=11 // pred_check
        %p282 = pneg %p202
      $region38: #{tpu_custom_call.1} parent=11 // pred_check_branch
        %284 = sbr.rel (%p282) target = $region40
      $region39: #{tpu_custom_call.1} parent=11 // pred_region
        _
      $region40: #{tpu_custom_call.1} parent=11 // pred_fallthru
        _
      // Predicated region
      $region41: #{tpu_custom_call.1} parent=11 // pred_check
        %p285 = pneg %p223
      $region42: #{tpu_custom_call.1} parent=11 // pred_check_branch
        %287 = sbr.rel (%p285) target = $region44
      $region43: #{tpu_custom_call.1} parent=11 // pred_region
        _
      $region44: #{tpu_custom_call.1} parent=11 // pred_fallthru
        _
    $region12: #{tpu_custom_call.1} parent=5 // pred_fallthru
      _
    %p288 = scmp.lt.s32.totalorder %s15, 4
    // Predicated region
    $region45: #{tpu_custom_call.1} parent=5 // pred_check
      %p289 = pneg %p288
    $region46: #{tpu_custom_call.1} parent=5 // pred_check_branch
      %291 = sbr.rel (%p289) target = $region48
    $region47: #{tpu_custom_call.1} parent=5 // pred_region
      // Predicated region
      $region49: #{tpu_custom_call.1} parent=47 // pred_check
        %p292 = pneg %p49
      $region50: #{tpu_custom_call.1} parent=47 // pred_check_branch
        %294 = sbr.rel (%p292) target = $region52
      $region51: #{tpu_custom_call.1} parent=47 // pred_region
        %s295 = smul.u32 2, %s23
        %p296 = scmp.lt.s32.totalorder %s22, 1
        %s297 = scalar_select %p296, %s22, 1
        %p298 = scmp.lt.s32.totalorder %s295, 3
        %s299 = scalar_select %p298, %s295, 3
        %s300 = smul.addr %s297, 4
        %s301 = sadd.s32 %s299, %s300
        %s302 = smul.addr %s301, 4
        %s303 = scalar_lea.vmem %s0, %s302
        %s304 = smul.u32 2, %s23
      $region52: #{tpu_custom_call.1} parent=47 // pred_fallthru
        _
    $region48: #{tpu_custom_call.1} parent=5 // pred_fallthru
      _
    %p305 = scmp.le.s32.totalorder 1, %s15
    %p306 = scmp.lt.s32.totalorder %s15, 5
    %p307 = pnand %p305, %p306
    %p308 = pneg %p307
    // Predicated region
    $region53: #{tpu_custom_call.1} parent=5 // pred_check
      _
    $region54: #{tpu_custom_call.1} parent=5 // pred_check_branch
      %310 = sbr.rel (%p307) target = $region56
    $region55: #{tpu_custom_call.1} parent=5 // pred_region
      %s311 = ssub.s32 %s15, 1
      %s312 = smul.u32 2, %s25
      %p313 = scmp.lt.s32.totalorder %s24, 1
      %s314 = scalar_select %p313, %s24, 1
      %p315 = scmp.lt.s32.totalorder %s312, 3
      %s316 = scalar_select %p315, %s312, 3
      %s317 = smul.addr %s314, 4
      %s318 = sadd.s32 %s316, %s317
      %s319 = smul.addr %s318, 4
      %s320 = scalar_lea.vmem %s0, %s319
      %p321 = pneg %p55
      %p322 = pneg %p52
      %p323 = pneg %p76
      %p324 = pneg %p73
      %p325 = pneg %p97
      %p326 = pneg %p94
      %p327 = pneg %p118
      %p328 = pneg %p115
      %p329 = pneg %p139
      %p330 = pneg %p136
      %p331 = pneg %p160
      %p332 = pneg %p157
      %p333 = pneg %p181
      %p334 = pneg %p178
      %p335 = pneg %p202
      %p336 = pneg %p199
      %p337 = pneg %p223
      %p338 = pneg %p220
      %p339 = pneg %p249
      %p340 = pneg %p246
      %p341 = scmp.lt.s32.totalorder %s24, 1
      %s342 = scalar_select %p341, %s24, 1
      %s343 = smul.addr %s342, 4
      %s344 = smul.addr %s343, 8
      %s345 = scalar_lea.vmem %s9, %s344
      %s346 = smul.u32 2, %s25
      %p347 = scmp.lt.s32.totalorder %s24, 1
      %s348 = scalar_select %p347, %s24, 1
      %p349 = scmp.lt.s32.totalorder %s346, 3
      %s350 = scalar_select %p349, %s346, 3
      %s351 = smul.addr %s348, 4
      %s352 = sadd.s32 %s350, %s351
      %s353 = smul.addr %s352, 4
      %s354 = scalar_lea.vmem %s0, %s353
      %s355 = smul.u32 2, %s25
      %p356 = scmp.lt.s32.totalorder %s24, 1
      %s357 = scalar_select %p356, %s24, 1
      %s358 = smul.addr %s357, 4
      %s359 = smul.addr %s358, 8
      %s360 = scalar_lea.vmem %s9, %s359
      %v362 = vld [vmem:[%s354] sm:$0x77]
      %v363 = vld [vmem:[%s1] sm:$0xff]
      %v364 = vld [vmem:[%s1 + $0x8] sm:$0xff]
      %v365 = vld [vmem:[%s1 + $0x10] sm:$0xff]
      %v366 = vld [vmem:[%s1 + $0x18] sm:$0xff]
      %v367 = vld [vmem:[%s1 + $0x20] sm:$0xff]
      %v368 = vld [vmem:[%s1 + $0x28] sm:$0xff]
      %v369 = vld [vmem:[%s1 + $0x30] sm:$0xff]
      %v370 = vld [vmem:[%s1 + $0x38] sm:$0xff]
      %372 = vset.pattern.permute.xlu0 0
      %373 = vperm.xlu0 %372, %v363
      %v374 = vpop.permute.xlu0 %373
      %377 = vset.pattern.permute.xlu0 0
      %378 = vperm.xlu0 %377, %v364
      %v379 = vpop.permute.xlu0 %378
      %382 = vset.pattern.permute.xlu0 0
      %383 = vperm.xlu0 %382, %v365
      %v384 = vpop.permute.xlu0 %383
      %387 = vset.pattern.permute.xlu0 0
      %388 = vperm.xlu0 %387, %v366
      %v389 = vpop.permute.xlu0 %388
      %392 = vset.pattern.permute.xlu0 0
      %393 = vperm.xlu0 %392, %v367
      %v394 = vpop.permute.xlu0 %393
      %397 = vset.pattern.permute.xlu0 0
      %398 = vperm.xlu0 %397, %v368
      %v399 = vpop.permute.xlu0 %398
      %402 = vset.pattern.permute.xlu0 0
      %403 = vperm.xlu0 %402, %v369
      %v404 = vpop.permute.xlu0 %403
      %407 = vset.pattern.permute.xlu0 0
      %408 = vperm.xlu0 %407, %v370
      %v409 = vpop.permute.xlu0 %408
      %v412 = vlaneseq
      %v413 = vshrl.u32 %v412, 7
      %v414 = vsub.s32 0, %v413
      %v415 = vrot.slane %v362, %v414
      %v416 = vlaneseq
      %v417 = vshrl.u32 %v416, 7
      %v418 = vsub.s32 4, %v417
      %v419 = vrot.slane %v362, %v418
      %v422 = vlaneseq
      %v423 = vshrl.u32 %v422, 7
      %v424 = vsub.s32 0, %v423
      %v425 = vrot.slane %v415, %v424
      %v426 = vlaneseq
      %v427 = vshrl.u32 %v426, 7
      %v428 = vsub.s32 0, %v427
      %v429 = vrot.slane %v419, %v428
      %v430 = vmul.f32 %v374, %v425
      %v431 = vmul.f32 %v374, %v429
      %v432 = vmul.f32 %v379, %v425
      %v433 = vmul.f32 %v379, %v429
      %v434 = vmul.f32 %v384, %v425
      %v435 = vmul.f32 %v384, %v429
      %v436 = vmul.f32 %v389, %v425
      %v437 = vmul.f32 %v389, %v429
      %v438 = vmul.f32 %v394, %v425
      %v439 = vmul.f32 %v394, %v429
      %v440 = vmul.f32 %v399, %v425
      %v441 = vmul.f32 %v399, %v429
      %v442 = vmul.f32 %v404, %v425
      %v443 = vmul.f32 %v404, %v429
      %v444 = vmul.f32 %v409, %v425
      %v445 = vmul.f32 %v409, %v429
      %446 = vset.pattern.permute.xlu0 1
      %447 = vperm.xlu0 %446, %v363
      %v448 = vpop.permute.xlu0 %447
      %450 = vset.pattern.permute.xlu0 1
      %451 = vperm.xlu0 %450, %v364
      %v452 = vpop.permute.xlu0 %451
      %454 = vset.pattern.permute.xlu0 1
      %455 = vperm.xlu0 %454, %v365
      %v456 = vpop.permute.xlu0 %455
      %458 = vset.pattern.permute.xlu0 1
      %459 = vperm.xlu0 %458, %v366
      %v460 = vpop.permute.xlu0 %459
      %462 = vset.pattern.permute.xlu0 1
      %463 = vperm.xlu0 %462, %v367
      %v464 = vpop.permute.xlu0 %463
      %466 = vset.pattern.permute.xlu0 1
      %467 = vperm.xlu0 %466, %v368
      %v468 = vpop.permute.xlu0 %467
      %470 = vset.pattern.permute.xlu0 1
      %471 = vperm.xlu0 %470, %v369
      %v472 = vpop.permute.xlu0 %471
      %474 = vset.pattern.permute.xlu0 1
      %475 = vperm.xlu0 %474, %v370
      %v476 = vpop.permute.xlu0 %475
      %v478 = vlaneseq
      %v479 = vshrl.u32 %v478, 7
      %v480 = vsub.s32 1, %v479
      %v481 = vrot.slane %v362, %v480
      %v482 = vlaneseq
      %v483 = vshrl.u32 %v482, 7
      %v484 = vsub.s32 5, %v483
      %v485 = vrot.slane %v362, %v484
      %v488 = vlaneseq
      %v489 = vshrl.u32 %v488, 7
      %v490 = vsub.s32 1, %v489
      %v491 = vrot.slane %v481, %v490
      %v492 = vlaneseq
      %v493 = vshrl.u32 %v492, 7
      %v494 = vsub.s32 1, %v493
      %v495 = vrot.slane %v485, %v494
      %v496 = vmul.f32 %v448, %v491
      %v497 = vmul.f32 %v448, %v495
      %v498 = vmul.f32 %v452, %v491
      %v499 = vmul.f32 %v452, %v495
      %v500 = vmul.f32 %v456, %v491
      %v501 = vmul.f32 %v456, %v495
      %v502 = vmul.f32 %v460, %v491
      %v503 = vmul.f32 %v460, %v495
      %v504 = vmul.f32 %v464, %v491
      %v505 = vmul.f32 %v464, %v495
      %v506 = vmul.f32 %v468, %v491
      %v507 = vmul.f32 %v468, %v495
      %v508 = vmul.f32 %v472, %v491
      %v509 = vmul.f32 %v472, %v495
      %v510 = vmul.f32 %v476, %v491
      %v511 = vmul.f32 %v476, %v495
      %v512 = vadd.f32 %v430, %v496
      %v513 = vadd.f32 %v431, %v497
      %v514 = vadd.f32 %v432, %v498
      %v515 = vadd.f32 %v433, %v499
      %v516 = vadd.f32 %v434, %v500
      %v517 = vadd.f32 %v435, %v501
      %v518 = vadd.f32 %v436, %v502
      %v519 = vadd.f32 %v437, %v503
      %v520 = vadd.f32 %v438, %v504
      %v521 = vadd.f32 %v439, %v505
      %v522 = vadd.f32 %v440, %v506
      %v523 = vadd.f32 %v441, %v507
      %v524 = vadd.f32 %v442, %v508
      %v525 = vadd.f32 %v443, %v509
      %v526 = vadd.f32 %v444, %v510
      %v527 = vadd.f32 %v445, %v511
      %528 = vset.pattern.permute.xlu0 2
      %529 = vperm.xlu0 %528, %v363
      %v530 = vpop.permute.xlu0 %529
      %532 = vset.pattern.permute.xlu0 2
      %533 = vperm.xlu0 %532, %v364
      %v534 = vpop.permute.xlu0 %533
      %536 = vset.pattern.permute.xlu0 2
      %537 = vperm.xlu0 %536, %v365
      %v538 = vpop.permute.xlu0 %537
      %540 = vset.pattern.permute.xlu0 2
      %541 = vperm.xlu0 %540, %v366
      %v542 = vpop.permute.xlu0 %541
      %544 = vset.pattern.permute.xlu0 2
      %545 = vperm.xlu0 %544, %v367
      %v546 = vpop.permute.xlu0 %545
      %548 = vset.pattern.permute.xlu0 2
      %549 = vperm.xlu0 %548, %v368
      %v550 = vpop.permute.xlu0 %549
      %552 = vset.pattern.permute.xlu0 2
      %553 = vperm.xlu0 %552, %v369
      %v554 = vpop.permute.xlu0 %553
      %556 = vset.pattern.permute.xlu0 2
      %557 = vperm.xlu0 %556, %v370
      %v558 = vpop.permute.xlu0 %557
      %v560 = vlaneseq
      %v561 = vshrl.u32 %v560, 7
      %v562 = vsub.s32 2, %v561
      %v563 = vrot.slane %v362, %v562
      %v564 = vlaneseq
      %v565 = vshrl.u32 %v564, 7
      %v566 = vsub.s32 6, %v565
      %v567 = vrot.slane %v362, %v566
      %v570 = vlaneseq
      %v571 = vshrl.u32 %v570, 7
      %v572 = vsub.s32 2, %v571
      %v573 = vrot.slane %v563, %v572
      %v574 = vlaneseq
      %v575 = vshrl.u32 %v574, 7
      %v576 = vsub.s32 2, %v575
      %v577 = vrot.slane %v567, %v576
      %v578 = vmul.f32 %v530, %v573
      %v579 = vmul.f32 %v530, %v577
      %v580 = vmul.f32 %v534, %v573
      %v581 = vmul.f32 %v534, %v577
      %v582 = vmul.f32 %v538, %v573
      %v583 = vmul.f32 %v538, %v577
      %v584 = vmul.f32 %v542, %v573
      %v585 = vmul.f32 %v542, %v577
      %v586 = vmul.f32 %v546, %v573
      %v587 = vmul.f32 %v546, %v577
      %v588 = vmul.f32 %v550, %v573
      %v589 = vmul.f32 %v550, %v577
      %v590 = vmul.f32 %v554, %v573
      %v591 = vmul.f32 %v554, %v577
      %v592 = vmul.f32 %v558, %v573
      %v593 = vmul.f32 %v558, %v577
      %v594 = vadd.f32 %v512, %v578
      %v595 = vadd.f32 %v513, %v579
      %v596 = vadd.f32 %v514, %v580
      %v597 = vadd.f32 %v515, %v581
      %v598 = vadd.f32 %v516, %v582
      %v599 = vadd.f32 %v517, %v583
      %v600 = vadd.f32 %v518, %v584
      %v601 = vadd.f32 %v519, %v585
      %v602 = vadd.f32 %v520, %v586
      %v603 = vadd.f32 %v521, %v587
      %v604 = vadd.f32 %v522, %v588
      %v605 = vadd.f32 %v523, %v589
      %v606 = vadd.f32 %v524, %v590
      %v607 = vadd.f32 %v525, %v591
      %v608 = vadd.f32 %v526, %v592
      %v609 = vadd.f32 %v527, %v593
      %v610 = vld [vmem:[%s2] sm:$0xff]
      %v611 = vld [vmem:[%s2 + $0x8] sm:$0xff]
      %v612 = vld [vmem:[%s2 + $0x10] sm:$0xff]
      %v613 = vld [vmem:[%s2 + $0x18] sm:$0xff]
      %v614 = vld [vmem:[%s2 + $0x20] sm:$0xff]
      %v615 = vld [vmem:[%s2 + $0x28] sm:$0xff]
      %v616 = vld [vmem:[%s2 + $0x30] sm:$0xff]
      %v617 = vld [vmem:[%s2 + $0x38] sm:$0xff]
      %619 = vset.pattern.permute.xlu0 0
      %620 = vperm.xlu0 %619, %v610
      %v621 = vpop.permute.xlu0 %620
      %624 = vset.pattern.permute.xlu0 0
      %625 = vperm.xlu0 %624, %v611
      %v626 = vpop.permute.xlu0 %625
      %629 = vset.pattern.permute.xlu0 0
      %630 = vperm.xlu0 %629, %v612
      %v631 = vpop.permute.xlu0 %630
      %634 = vset.pattern.permute.xlu0 0
      %635 = vperm.xlu0 %634, %v613
      %v636 = vpop.permute.xlu0 %635
      %639 = vset.pattern.permute.xlu0 0
      %640 = vperm.xlu0 %639, %v614
      %v641 = vpop.permute.xlu0 %640
      %644 = vset.pattern.permute.xlu0 0
      %645 = vperm.xlu0 %644, %v615
      %v646 = vpop.permute.xlu0 %645
      %649 = vset.pattern.permute.xlu0 0
      %650 = vperm.xlu0 %649, %v616
      %v651 = vpop.permute.xlu0 %650
      %654 = vset.pattern.permute.xlu0 0
      %655 = vperm.xlu0 %654, %v617
      %v656 = vpop.permute.xlu0 %655
      %v658 = vadd.f32 %v594, %v621
      %v659 = vadd.f32 %v595, %v621
      %v660 = vadd.f32 %v596, %v626
      %v661 = vadd.f32 %v597, %v626
      %v662 = vadd.f32 %v598, %v631
      %v663 = vadd.f32 %v599, %v631
      %v664 = vadd.f32 %v600, %v636
      %v665 = vadd.f32 %v601, %v636
      %v666 = vadd.f32 %v602, %v641
      %v667 = vadd.f32 %v603, %v641
      %v668 = vadd.f32 %v604, %v646
      %v669 = vadd.f32 %v605, %v646
      %v670 = vadd.f32 %v606, %v651
      %v671 = vadd.f32 %v607, %v651
      %v672 = vadd.f32 %v608, %v656
      %v673 = vadd.f32 %v609, %v656
      %v674 = vmax.f32 %v658, 0.0
      %v675 = vmax.f32 %v659, 0.0
      %v676 = vmax.f32 %v660, 0.0
      %v677 = vmax.f32 %v661, 0.0
      %v678 = vmax.f32 %v662, 0.0
      %v679 = vmax.f32 %v663, 0.0
      %v680 = vmax.f32 %v664, 0.0
      %v681 = vmax.f32 %v665, 0.0
      %v682 = vmax.f32 %v666, 0.0
      %v683 = vmax.f32 %v667, 0.0
      %v684 = vmax.f32 %v668, 0.0
      %v685 = vmax.f32 %v669, 0.0
      %v686 = vmax.f32 %v670, 0.0
      %v687 = vmax.f32 %v671, 0.0
      %v688 = vmax.f32 %v672, 0.0
      %v689 = vmax.f32 %v673, 0.0
      %v690 = vld [vmem:[%s3] sm:$0xf]
      %v691 = vld [vmem:[%s3 + $0x4] sm:$0xf]
      %v692 = vld [vmem:[%s3 + $0x8] sm:$0xf]
      %v693 = vld [vmem:[%s3 + $0xc] sm:$0xf]
      %v694 = vld [vmem:[%s3 + $0x10] sm:$0xf]
      %v695 = vld [vmem:[%s3 + $0x14] sm:$0xf]
      %v696 = vld [vmem:[%s3 + $0x18] sm:$0xf]
      %v697 = vld [vmem:[%s3 + $0x1c] sm:$0xf]
      %v698 = vld [vmem:[%s3 + $0x20] sm:$0xf]
      %v699 = vld [vmem:[%s3 + $0x24] sm:$0xf]
      %v700 = vld [vmem:[%s3 + $0x28] sm:$0xf]
      %v701 = vld [vmem:[%s3 + $0x2c] sm:$0xf]
      %v702 = vld [vmem:[%s3 + $0x30] sm:$0xf]
      %v703 = vld [vmem:[%s3 + $0x34] sm:$0xf]
      %v704 = vld [vmem:[%s3 + $0x38] sm:$0xf]
      %v705 = vld [vmem:[%s3 + $0x3c] sm:$0xf]
      %v706 = vpack.c.bf16 %v676, %v674
      %v707 = vpack.c.bf16 %v677, %v675
      %v708 = vpack.c.bf16 %v680, %v678
      %v709 = vpack.c.bf16 %v681, %v679
      %v710 = vpack.c.bf16 %v684, %v682
      %v711 = vpack.c.bf16 %v685, %v683
      %v712 = vpack.c.bf16 %v688, %v686
      %v713 = vpack.c.bf16 %v689, %v687
      %v714 = vld [vmem:[%s4] sm:$0xff]
      %v715 = vld [vmem:[%s4 + $0x8] sm:$0xff]
      %v716 = vld [vmem:[%s4 + $0x10] sm:$0xff]
      %v717 = vld [vmem:[%s4 + $0x18] sm:$0xff]
      %v718 = vld [vmem:[%s4 + $0x20] sm:$0xff]
      %v719 = vld [vmem:[%s4 + $0x28] sm:$0xff]
      %v720 = vld [vmem:[%s4 + $0x30] sm:$0xff]
      %v721 = vld [vmem:[%s4 + $0x38] sm:$0xff]
      %v722 = vld [vmem:[%s4 + $0x40] sm:$0xff]
      %v723 = vld [vmem:[%s4 + $0x48] sm:$0xff]
      %v724 = vld [vmem:[%s4 + $0x50] sm:$0xff]
      %v725 = vld [vmem:[%s4 + $0x58] sm:$0xff]
      %v726 = vld [vmem:[%s4 + $0x60] sm:$0xff]
      %v727 = vld [vmem:[%s4 + $0x68] sm:$0xff]
      %v728 = vld [vmem:[%s4 + $0x70] sm:$0xff]
      %v729 = vld [vmem:[%s4 + $0x78] sm:$0xff]
      %731 = vset.pattern.permute.xlu0 0
      %732 = vperm.xlu0 %731, %v714
      %v733 = vpop.permute.xlu0 %732
      %736 = vset.pattern.permute.xlu0 0
      %737 = vperm.xlu0 %736, %v715
      %v738 = vpop.permute.xlu0 %737
      %741 = vset.pattern.permute.xlu0 0
      %742 = vperm.xlu0 %741, %v716
      %v743 = vpop.permute.xlu0 %742
      %746 = vset.pattern.permute.xlu0 0
      %747 = vperm.xlu0 %746, %v717
      %v748 = vpop.permute.xlu0 %747
      %751 = vset.pattern.permute.xlu0 0
      %752 = vperm.xlu0 %751, %v718
      %v753 = vpop.permute.xlu0 %752
      %756 = vset.pattern.permute.xlu0 0
      %757 = vperm.xlu0 %756, %v719
      %v758 = vpop.permute.xlu0 %757
      %761 = vset.pattern.permute.xlu0 0
      %762 = vperm.xlu0 %761, %v720
      %v763 = vpop.permute.xlu0 %762
      %766 = vset.pattern.permute.xlu0 0
      %767 = vperm.xlu0 %766, %v721
      %v768 = vpop.permute.xlu0 %767
      %771 = vset.pattern.permute.xlu0 0
      %772 = vperm.xlu0 %771, %v722
      %v773 = vpop.permute.xlu0 %772
      %776 = vset.pattern.permute.xlu0 0
      %777 = vperm.xlu0 %776, %v723
      %v778 = vpop.permute.xlu0 %777
      %781 = vset.pattern.permute.xlu0 0
      %782 = vperm.xlu0 %781, %v724
      %v783 = vpop.permute.xlu0 %782
      %786 = vset.pattern.permute.xlu0 0
      %787 = vperm.xlu0 %786, %v725
      %v788 = vpop.permute.xlu0 %787
      %791 = vset.pattern.permute.xlu0 0
      %792 = vperm.xlu0 %791, %v726
      %v793 = vpop.permute.xlu0 %792
      %796 = vset.pattern.permute.xlu0 0
      %797 = vperm.xlu0 %796, %v727
      %v798 = vpop.permute.xlu0 %797
      %801 = vset.pattern.permute.xlu0 0
      %802 = vperm.xlu0 %801, %v728
      %v803 = vpop.permute.xlu0 %802
      %806 = vset.pattern.permute.xlu0 0
      %807 = vperm.xlu0 %806, %v729
      %v808 = vpop.permute.xlu0 %807
      %v826 = vunpack.c.l.b16 %v690
      %v827 = vunpack.c.l.b16 %v691
      %v828 = vunpack.c.l.b16 %v692
      %v829 = vunpack.c.l.b16 %v693
      %v830 = vunpack.c.l.b16 %v694
      %v831 = vunpack.c.l.b16 %v695
      %v832 = vunpack.c.l.b16 %v696
      %v833 = vunpack.c.l.b16 %v697
      %v834 = vunpack.c.l.b16 %v698
      %v835 = vunpack.c.l.b16 %v699
      %v836 = vunpack.c.l.b16 %v700
      %v837 = vunpack.c.l.b16 %v701
      %v838 = vunpack.c.l.b16 %v702
      %v839 = vunpack.c.l.b16 %v703
      %v840 = vunpack.c.l.b16 %v704
      %v841 = vunpack.c.l.b16 %v705
      %v842 = vpack.c.b16 %v827, %v826
      %v843 = vpack.c.b16 %v829, %v828
      %v844 = vpack.c.b16 %v831, %v830
      %v845 = vpack.c.b16 %v833, %v832
      %v846 = vpack.c.b16 %v835, %v834
      %v847 = vpack.c.b16 %v837, %v836
      %v848 = vpack.c.b16 %v839, %v838
      %v849 = vpack.c.b16 %v841, %v840
      %vm850 = vcmask 523264
      %v852 = vsel %vm850, %v842, 0
      %v855 = vsel %vm850, %v843, 0
      %v858 = vsel %vm850, %v844, 0
      %v861 = vsel %vm850, %v845, 0
      %v864 = vsel %vm850, %v846, 0
      %v867 = vsel %vm850, %v847, 0
      %v870 = vsel %vm850, %v848, 0
      %v873 = vsel %vm850, %v849, 0
      %875 = vmatprep.subr.bf16.mxu0 %v707
      %876 = vmatpush1.bf16.msra.mxu0 %v706
      %877 = vmatprep.subr.bf16.mxu0 %v709
      %878 = vmatpush1.bf16.msra.mxu0 %v708
      %879 = vmatprep.subr.bf16.mxu0 %v711
      %880 = vmatpush1.bf16.msra.mxu0 %v710
      %881 = vmatprep.subr.bf16.mxu0 %v713
      %882 = vmatpush1.bf16.msra.mxu0 %v712
      %883 = vmatprep.subr.bf16.mxu0 0
      %884 = vmatpush1.bf16.msra.mxu0 0
      %885 = vmatprep.subr.bf16.mxu0 0
      %886 = vmatpush1.bf16.msra.mxu0 0
      %887 = vmatprep.subr.bf16.mxu0 0
      %888 = vmatpush1.bf16.msra.mxu0 0
      %889 = vmatprep.subr.bf16.mxu0 0
      %890 = vmatpush1.bf16.msra.mxu0 0
      %891 = vmatprep.subr.bf16.mxu0 0
      %892 = vmatpush1.bf16.msra.mxu0 0
      %893 = vmatprep.subr.bf16.mxu0 0
      %894 = vmatpush1.bf16.msra.mxu0 0
      %895 = vmatprep.subr.bf16.mxu0 0
      %896 = vmatpush1.bf16.msra.mxu0 0
      %897 = vmatprep.subr.bf16.mxu0 0
      %898 = vmatpush1.bf16.msra.mxu0 0
      %899 = vmatprep.subr.bf16.mxu0 0
      %900 = vmatpush1.bf16.msra.mxu0 0
      %901 = vmatprep.subr.bf16.mxu0 0
      %902 = vmatpush1.bf16.msra.mxu0 0
      %903 = vmatprep.subr.bf16.mxu0 0
      %904 = vmatpush1.bf16.msra.mxu0 0
      %905 = vmatprep.subr.bf16.mxu0 0
      %906 = vmatpush1.bf16.msra.mxu0 0
      %907 = vmatprep.mubr.bf16.mxu0 0
      %908 = vmatmul.mubr.bf16.gmra.mrb[0].mxu0 %v852
      %v909 = vpop.f32.mrb[0].mxu0
      %v910 = vadd.f32 %v733, %v909
      %v911 = vpop.f32.mrb[0].mxu0
      %v912 = vadd.f32 %v733, %v911
      %v913 = vpop.f32.mrb[0].mxu0
      %v914 = vadd.f32 %v738, %v913
      %v915 = vpop.f32.mrb[0].mxu0
      %v916 = vadd.f32 %v738, %v915
      %917 = vmatprep.mubr.bf16.mxu0 0
      %918 = vmatmul.mubr.bf16.gmra.mrb[0].mxu0 %v855
      %v919 = vpop.f32.mrb[0].mxu0
      %v920 = vadd.f32 %v743, %v919
      %v921 = vpop.f32.mrb[0].mxu0
      %v922 = vadd.f32 %v743, %v921
      %v923 = vpop.f32.mrb[0].mxu0
      %v924 = vadd.f32 %v748, %v923
      %v925 = vpop.f32.mrb[0].mxu0
      %v926 = vadd.f32 %v748, %v925
      %927 = vmatprep.mubr.bf16.mxu0 0
      %928 = vmatmul.mubr.bf16.gmra.mrb[0].mxu0 %v858
      %v929 = vpop.f32.mrb[0].mxu0
      %v930 = vadd.f32 %v753, %v929
      %v931 = vpop.f32.mrb[0].mxu0
      %v932 = vadd.f32 %v753, %v931
      %v933 = vpop.f32.mrb[0].mxu0
      %v934 = vadd.f32 %v758, %v933
      %v935 = vpop.f32.mrb[0].mxu0
      %v936 = vadd.f32 %v758, %v935
      %937 = vmatprep.mubr.bf16.mxu0 0
      %938 = vmatmul.mubr.bf16.gmra.mrb[0].mxu0 %v861
      %v939 = vpop.f32.mrb[0].mxu0
      %v940 = vadd.f32 %v763, %v939
      %v941 = vpop.f32.mrb[0].mxu0
      %v942 = vadd.f32 %v763, %v941
      %v943 = vpop.f32.mrb[0].mxu0
      %v944 = vadd.f32 %v768, %v943
      %v945 = vpop.f32.mrb[0].mxu0
      %v946 = vadd.f32 %v768, %v945
      %947 = vmatprep.mubr.bf16.mxu0 0
      %948 = vmatmul.mubr.bf16.gmra.mrb[0].mxu0 %v864
      %v949 = vpop.f32.mrb[0].mxu0
      %v950 = vadd.f32 %v773, %v949
      %v951 = vpop.f32.mrb[0].mxu0
      %v952 = vadd.f32 %v773, %v951
      %v953 = vpop.f32.mrb[0].mxu0
      %v954 = vadd.f32 %v778, %v953
      %v955 = vpop.f32.mrb[0].mxu0
      %v956 = vadd.f32 %v778, %v955
      %957 = vmatprep.mubr.bf16.mxu0 0
      %958 = vmatmul.mubr.bf16.gmra.mrb[0].mxu0 %v867
      %v959 = vpop.f32.mrb[0].mxu0
      %v960 = vadd.f32 %v783, %v959
      %v961 = vpop.f32.mrb[0].mxu0
      %v962 = vadd.f32 %v783, %v961
      %v963 = vpop.f32.mrb[0].mxu0
      %v964 = vadd.f32 %v788, %v963
      %v965 = vpop.f32.mrb[0].mxu0
      %v966 = vadd.f32 %v788, %v965
      %967 = vmatprep.mubr.bf16.mxu0 0
      %968 = vmatmul.mubr.bf16.gmra.mrb[0].mxu0 %v870
      %v969 = vpop.f32.mrb[0].mxu0
      %v970 = vadd.f32 %v793, %v969
      %v971 = vpop.f32.mrb[0].mxu0
      %v972 = vadd.f32 %v793, %v971
      %v973 = vpop.f32.mrb[0].mxu0
      %v974 = vadd.f32 %v798, %v973
      %v975 = vpop.f32.mrb[0].mxu0
      %v976 = vadd.f32 %v798, %v975
      %977 = vmatprep.mubr.bf16.mxu0 0
      %978 = vmatmul.mubr.bf16.gmra.mrb[0].mxu0 %v873
      %v979 = vpop.f32.mrb[0].mxu0
      %v980 = vadd.f32 %v803, %v979
      %v981 = vpop.f32.mrb[0].mxu0
      %v982 = vadd.f32 %v803, %v981
      %v983 = vpop.f32.mrb[0].mxu0
      %v984 = vadd.f32 %v808, %v983
      %v985 = vpop.f32.mrb[0].mxu0
      %v986 = vadd.f32 %v808, %v985
      %987 = vdwg.mxu0
      %v988 = vmax.f32 %v910, 0.0
      %v989 = vmax.f32 %v912, 0.0
      %v990 = vmax.f32 %v914, 0.0
      %v991 = vmax.f32 %v916, 0.0
      %v992 = vmax.f32 %v920, 0.0
      %v993 = vmax.f32 %v922, 0.0
      %v994 = vmax.f32 %v924, 0.0
      %v995 = vmax.f32 %v926, 0.0
      %v996 = vmax.f32 %v930, 0.0
      %v997 = vmax.f32 %v932, 0.0
      %v998 = vmax.f32 %v934, 0.0
      %v999 = vmax.f32 %v936, 0.0
      %v1000 = vmax.f32 %v940, 0.0
      %v1001 = vmax.f32 %v942, 0.0
      %v1002 = vmax.f32 %v944, 0.0
      %v1003 = vmax.f32 %v946, 0.0
      %v1004 = vmax.f32 %v950, 0.0
      %v1005 = vmax.f32 %v952, 0.0
      %v1006 = vmax.f32 %v954, 0.0
      %v1007 = vmax.f32 %v956, 0.0
      %v1008 = vmax.f32 %v960, 0.0
      %v1009 = vmax.f32 %v962, 0.0
      %v1010 = vmax.f32 %v964, 0.0
      %v1011 = vmax.f32 %v966, 0.0
      %v1012 = vmax.f32 %v970, 0.0
      %v1013 = vmax.f32 %v972, 0.0
      %v1014 = vmax.f32 %v974, 0.0
      %v1015 = vmax.f32 %v976, 0.0
      %v1016 = vmax.f32 %v980, 0.0
      %v1017 = vmax.f32 %v982, 0.0
      %v1018 = vmax.f32 %v984, 0.0
      %v1019 = vmax.f32 %v986, 0.0
      %v1020 = vld [vmem:[%s5] sm:$0xf]
      %v1021 = vld [vmem:[%s5 + $0x4] sm:$0xf]
      %v1022 = vld [vmem:[%s5 + $0x8] sm:$0xf]
      %v1023 = vld [vmem:[%s5 + $0xc] sm:$0xf]
      %v1024 = vpack.c.bf16 %v990, %v988
      %v1025 = vpack.c.bf16 %v991, %v989
      %v1026 = vpack.c.bf16 %v994, %v992
      %v1027 = vpack.c.bf16 %v995, %v993
      %v1028 = vpack.c.bf16 %v998, %v996
      %v1029 = vpack.c.bf16 %v999, %v997
      %v1030 = vpack.c.bf16 %v1002, %v1000
      %v1031 = vpack.c.bf16 %v1003, %v1001
      %v1032 = vpack.c.bf16 %v1006, %v1004
      %v1033 = vpack.c.bf16 %v1007, %v1005
      %v1034 = vpack.c.bf16 %v1010, %v1008
      %v1035 = vpack.c.bf16 %v1011, %v1009
      %v1036 = vpack.c.bf16 %v1014, %v1012
      %v1037 = vpack.c.bf16 %v1015, %v1013
      %v1038 = vpack.c.bf16 %v1018, %v1016
      %v1039 = vpack.c.bf16 %v1019, %v1017
      %v1040 = vld [vmem:[%s6] sm:$0xff]
      %v1041 = vld [vmem:[%s6 + $0x8] sm:$0xff]
      %v1042 = vld [vmem:[%s6 + $0x10] sm:$0xff]
      %v1043 = vld [vmem:[%s6 + $0x18] sm:$0xff]
      %1045 = vset.pattern.permute.xlu0 0
      %1046 = vperm.xlu0 %1045, %v1040
      %v1047 = vpop.permute.xlu0 %1046
      %1050 = vset.pattern.permute.xlu0 0
      %1051 = vperm.xlu0 %1050, %v1041
      %v1052 = vpop.permute.xlu0 %1051
      %1055 = vset.pattern.permute.xlu0 0
      %1056 = vperm.xlu0 %1055, %v1042
      %v1057 = vpop.permute.xlu0 %1056
      %1060 = vset.pattern.permute.xlu0 0
      %1061 = vperm.xlu0 %1060, %v1043
      %v1062 = vpop.permute.xlu0 %1061
      %v1068 = vunpack.c.l.b16 %v1020
      %v1069 = vunpack.c.l.b16 %v1021
      %v1070 = vunpack.c.l.b16 %v1022
      %v1071 = vunpack.c.l.b16 %v1023
      %v1072 = vpack.c.b16 %v1069, %v1068
      %v1073 = vpack.c.b16 %v1071, %v1070
      %1076 = vmatprep.subr.bf16.mxu0 %v1025
      %1077 = vmatpush1.bf16.msra.mxu0 %v1024
      %1078 = vmatprep.subr.bf16.mxu0 %v1027
      %1079 = vmatpush1.bf16.msra.mxu0 %v1026
      %1080 = vmatprep.subr.bf16.mxu0 %v1029
      %1081 = vmatpush1.bf16.msra.mxu0 %v1028
      %1082 = vmatprep.subr.bf16.mxu0 %v1031
      %1083 = vmatpush1.bf16.msra.mxu0 %v1030
      %1084 = vmatprep.subr.bf16.mxu0 %v1033
      %1085 = vmatpush1.bf16.msra.mxu0 %v1032
      %1086 = vmatprep.subr.bf16.mxu0 %v1035
      %1087 = vmatpush1.bf16.msra.mxu0 %v1034
      %1088 = vmatprep.subr.bf16.mxu0 %v1037
      %1089 = vmatpush1.bf16.msra.mxu0 %v1036
      %1090 = vmatprep.subr.bf16.mxu0 %v1039
      %1091 = vmatpush1.bf16.msra.mxu0 %v1038
      %1092 = vmatprep.subr.bf16.mxu0 0
      %1093 = vmatpush1.bf16.msra.mxu0 0
      %1094 = vmatprep.subr.bf16.mxu0 0
      %1095 = vmatpush1.bf16.msra.mxu0 0
      %1096 = vmatprep.subr.bf16.mxu0 0
      %1097 = vmatpush1.bf16.msra.mxu0 0
      %1098 = vmatprep.subr.bf16.mxu0 0
      %1099 = vmatpush1.bf16.msra.mxu0 0
      %1100 = vmatprep.subr.bf16.mxu0 0
      %1101 = vmatpush1.bf16.msra.mxu0 0
      %1102 = vmatprep.subr.bf16.mxu0 0
      %1103 = vmatpush1.bf16.msra.mxu0 0
      %1104 = vmatprep.subr.bf16.mxu0 0
      %1105 = vmatpush1.bf16.msra.mxu0 0
      %1106 = vmatprep.subr.bf16.mxu0 0
      %1107 = vmatpush1.bf16.msra.mxu0 0
      %1108 = vmatprep.mubr.bf16.mxu0 0
      %1109 = vmatmul.mubr.bf16.gmra.mrb[0].mxu0 %v1072
      %v1110 = vpop.f32.mrb[0].mxu0
      %v1111 = vadd.f32 %v1047, %v1110
      %v1112 = vpop.f32.mrb[0].mxu0
      %v1113 = vadd.f32 %v1047, %v1112
      %v1114 = vpop.f32.mrb[0].mxu0
      %v1115 = vadd.f32 %v1052, %v1114
      %v1116 = vpop.f32.mrb[0].mxu0
      %v1117 = vadd.f32 %v1052, %v1116
      %1118 = vmatprep.mubr.bf16.mxu0 0
      %1119 = vmatmul.mubr.bf16.gmra.mrb[0].mxu0 %v1073
      %v1120 = vpop.f32.mrb[0].mxu0
      %v1121 = vadd.f32 %v1057, %v1120
      %v1122 = vpop.f32.mrb[0].mxu0
      %v1123 = vadd.f32 %v1057, %v1122
      %v1124 = vpop.f32.mrb[0].mxu0
      %v1125 = vadd.f32 %v1062, %v1124
      %v1126 = vpop.f32.mrb[0].mxu0
      %v1127 = vadd.f32 %v1062, %v1126
      %1128 = vdwg.mxu0
      %v1129 = vmax.f32 %v1111, %v1113
      %1130 = vmax.xlane.f32.xlu0 %v1129
      %v1131 = vpop.xlane.xlu0 %1130
      %v1132 = vmax.f32 %v1115, %v1117
      %1133 = vmax.xlane.f32.xlu0 %v1132
      %v1134 = vpop.xlane.xlu0 %1133
      %v1135 = vmax.f32 %v1121, %v1123
      %1136 = vmax.xlane.f32.xlu0 %v1135
      %v1137 = vpop.xlane.xlu0 %1136
      %v1138 = vmax.f32 %v1125, %v1127
      %1139 = vmax.xlane.f32.xlu0 %v1138
      %v1140 = vpop.xlane.xlu0 %1139
      %p1141 = scmp.eq.s32.totalorder %s25, 0
      // Predicated region
      $region57: #{tpu_custom_call.1} parent=55 // pred_check
        %p1142 = pneg %p1141
      $region58: #{tpu_custom_call.1} parent=55 // pred_check_branch
        %1144 = sbr.rel (%p1142) target = $region60
      $region59: #{tpu_custom_call.1} parent=55 // pred_region
        %vm1145 = vcmask 7168
        %1146 = vst.msk [vmem:[#allocation2] sm:$0xff] %vm1145, -inf
        %1147 = vst.msk [vmem:[#allocation2 + $0x8] sm:$0xff] %vm1145, -inf
        %1148 = vst.msk [vmem:[#allocation2 + $0x10] sm:$0xff] %vm1145, -inf
        %1149 = vst.msk [vmem:[#allocation2 + $0x18] sm:$0xff] %vm1145, -inf
      $region60: #{tpu_custom_call.1} parent=55 // pred_fallthru
        _
      %v1150 = vld [vmem:[#allocation2] sm:$0xff]
      %v1151 = vld [vmem:[#allocation2 + $0x8] sm:$0xff]
      %v1152 = vld [vmem:[#allocation2 + $0x10] sm:$0xff]
      %v1153 = vld [vmem:[#allocation2 + $0x18] sm:$0xff]
      %v1154 = vmax.f32 %v1150, %v1131
      %v1155 = vmax.f32 %v1151, %v1134
      %v1156 = vmax.f32 %v1152, %v1137
      %v1157 = vmax.f32 %v1153, %v1140
      %vm1158 = vcmask 7168
      %1159 = vst.msk [vmem:[#allocation2] sm:$0xff] %vm1158, %v1154
      %1160 = vst.msk [vmem:[#allocation2 + $0x8] sm:$0xff] %vm1158, %v1155
      %1161 = vst.msk [vmem:[#allocation2 + $0x10] sm:$0xff] %vm1158, %v1156
      %1162 = vst.msk [vmem:[#allocation2 + $0x18] sm:$0xff] %vm1158, %v1157
      %p1163 = scmp.eq.s32.totalorder %s25, 1
      // Predicated region
      $region61: #{tpu_custom_call.1} parent=55 // pred_check
        %p1164 = pneg %p1163
      $region62: #{tpu_custom_call.1} parent=55 // pred_check_branch
        %1166 = sbr.rel (%p1164) target = $region64
      $region63: #{tpu_custom_call.1} parent=55 // pred_region
        %v1167 = vld [vmem:[%s7] sm:$0xf]
        %v1168 = vld [vmem:[%s7 + $0x4] sm:$0xf]
        %v1169 = vld [vmem:[%s7 + $0x8] sm:$0xf]
        %v1170 = vld [vmem:[%s7 + $0xc] sm:$0xf]
        %v1171 = vld [vmem:[#allocation2] sm:$0xff]
        %v1172 = vld [vmem:[#allocation2 + $0x8] sm:$0xff]
        %v1173 = vld [vmem:[#allocation2 + $0x10] sm:$0xff]
        %v1174 = vld [vmem:[#allocation2 + $0x18] sm:$0xff]
        %v1175 = vpack.c.bf16 %v1172, %v1171
        %v1176 = vpack.c.bf16 %v1174, %v1173
        %v1177 = vld [vmem:[%s8] sm:$0xff]
        %v1178 = vld [vmem:[%s8 + $0x8] sm:$0xff]
        %v1179 = vld [vmem:[%s8 + $0x10] sm:$0xff]
        %v1180 = vld [vmem:[%s8 + $0x18] sm:$0xff]
        %v1185 = vunpack.c.l.b16 %v1167
        %v1186 = vunpack.c.l.b16 %v1168
        %v1187 = vunpack.c.l.b16 %v1169
        %v1188 = vunpack.c.l.b16 %v1170
        %v1189 = vpack.c.b16 %v1186, %v1185
        %v1190 = vpack.c.b16 %v1188, %v1187
        %vm1191 = vcmask 261120
        %v1193 = vsel %vm1191, %v1189, 0
        %v1196 = vsel %vm1191, %v1190, 0
        %1198 = vmatprep.subr.bf16.mxu0 0
        %1199 = vmatpush1.bf16.msra.mxu0 %v1175
        %1200 = vmatprep.subr.bf16.mxu0 0
        %1201 = vmatpush1.bf16.msra.mxu0 %v1176
        %1202 = vmatprep.subr.bf16.mxu0 0
        %1203 = vmatpush1.bf16.msra.mxu0 0
        %1204 = vmatprep.subr.bf16.mxu0 0
        %1205 = vmatpush1.bf16.msra.mxu0 0
        %1206 = vmatprep.subr.bf16.mxu0 0
        %1207 = vmatpush1.bf16.msra.mxu0 0
        %1208 = vmatprep.subr.bf16.mxu0 0
        %1209 = vmatpush1.bf16.msra.mxu0 0
        %1210 = vmatprep.subr.bf16.mxu0 0
        %1211 = vmatpush1.bf16.msra.mxu0 0
        %1212 = vmatprep.subr.bf16.mxu0 0
        %1213 = vmatpush1.bf16.msra.mxu0 0
        %1214 = vmatprep.subr.bf16.mxu0 0
        %1215 = vmatpush1.bf16.msra.mxu0 0
        %1216 = vmatprep.subr.bf16.mxu0 0
        %1217 = vmatpush1.bf16.msra.mxu0 0
        %1218 = vmatprep.subr.bf16.mxu0 0
        %1219 = vmatpush1.bf16.msra.mxu0 0
        %1220 = vmatprep.subr.bf16.mxu0 0
        %1221 = vmatpush1.bf16.msra.mxu0 0
        %1222 = vmatprep.subr.bf16.mxu0 0
        %1223 = vmatpush1.bf16.msra.mxu0 0
        %1224 = vmatprep.subr.bf16.mxu0 0
        %1225 = vmatpush1.bf16.msra.mxu0 0
        %1226 = vmatprep.subr.bf16.mxu0 0
        %1227 = vmatpush1.bf16.msra.mxu0 0
        %1228 = vmatprep.subr.bf16.mxu0 0
        %1229 = vmatpush1.bf16.msra.mxu0 0
        %1230 = vmatprep.mubr.bf16.mxu0 0
        %1231 = vmatmul.mubr.bf16.gmra.mrb[0].mxu0 %v1193
        %v1232 = vpop.f32.mrb[0].mxu0
        %v1233 = vadd.f32 %v1177, %v1232
        %v1234 = vpop.f32.mrb[0].mxu0
        %v1235 = vpop.f32.mrb[0].mxu0
        %v1236 = vadd.f32 %v1178, %v1235
        %v1237 = vpop.f32.mrb[0].mxu0
        %1238 = vmatprep.mubr.bf16.mxu0 0
        %1239 = vmatmul.mubr.bf16.gmra.mrb[0].mxu0 %v1196
        %v1240 = vpop.f32.mrb[0].mxu0
        %v1241 = vadd.f32 %v1179, %v1240
        %v1242 = vpop.f32.mrb[0].mxu0
        %v1243 = vpop.f32.mrb[0].mxu0
        %v1244 = vadd.f32 %v1180, %v1243
        %v1245 = vpop.f32.mrb[0].mxu0
        %1246 = vdwg.mxu0
        %v1247 = vmax.f32 %v1233, 0.0
        %v1248 = vmax.f32 %v1236, 0.0
        %v1249 = vmax.f32 %v1241, 0.0
        %v1250 = vmax.f32 %v1244, 0.0
        %1251 = vst.msk [vmem:[%s360] sm:$0xff] %vm1158, %v1247
        %1252 = vst.msk [vmem:[%s360 + $0x8] sm:$0xff] %vm1158, %v1248
        %1253 = vst.msk [vmem:[%s360 + $0x10] sm:$0xff] %vm1158, %v1249
        %1254 = vst.msk [vmem:[%s360 + $0x18] sm:$0xff] %vm1158, %v1250
      $region64: #{tpu_custom_call.1} parent=55 // pred_fallthru
        _
      %p1255 = scmp.lt.s32.totalorder %s24, 1
      %s1256 = scalar_select %p1255, %s24, 1
      %s1257 = smul.addr %s1256, 4
      %s1258 = smul.addr %s1257, 8
      %s1259 = scalar_lea.vmem %s9, %s1258
      // Predicated region
      $region65: #{tpu_custom_call.1} parent=55 // pred_check
        %p1260 = pneg %p246
      $region66: #{tpu_custom_call.1} parent=55 // pred_check_branch
        %1262 = sbr.rel (%p1260) target = $region68
      $region67: #{tpu_custom_call.1} parent=55 // pred_region
        _
      $region68: #{tpu_custom_call.1} parent=55 // pred_fallthru
        _
    $region56: #{tpu_custom_call.1} parent=5 // pred_fallthru
      _
    %p1263 = scmp.le.s32.totalorder 2, %s15
    // Predicated region
    $region69: #{tpu_custom_call.1} parent=5 // pred_check
      %p1264 = pneg %p1263
    $region70: #{tpu_custom_call.1} parent=5 // pred_check_branch
      %1266 = sbr.rel (%p1264) target = $region72
    $region71: #{tpu_custom_call.1} parent=5 // pred_region
      %s1267 = ssub.s32 %s15, 2
      // Predicated region
      $region73: #{tpu_custom_call.1} parent=71 // pred_check
        %p1268 = pneg %p252
      $region74: #{tpu_custom_call.1} parent=71 // pred_check_branch
        %1270 = sbr.rel (%p1268) target = $region76
      $region75: #{tpu_custom_call.1} parent=71 // pred_region
        %p1271 = scmp.lt.s32.totalorder %s26, 1
        %s1272 = scalar_select %p1271, %s26, 1
        %s1273 = smul.addr %s1272, 4
        %s1274 = smul.addr %s1273, 8
        %s1275 = scalar_lea.vmem %s9, %s1274
      $region76: #{tpu_custom_call.1} parent=71 // pred_fallthru
        _
    $region72: #{tpu_custom_call.1} parent=5 // pred_fallthru
      _
  $region6: #{tpu_custom_call.1} parent=0 // loop_footer
    %s19 = sadd.s32 1, %s15
  $region7: #{tpu_custom_call.1} parent=0 // loop_footer_branch
    %14 = sbr.rel target = $region3
  $region8: #{tpu_custom_call.1} parent=0 // loop_exit
    _

</llo_original>
